<compile_context>
chip_gen: v7x
topology: tpu7x:2x2x1
jax: 0.10.0
libtpu: 0.0.40
codegen_flags: <defaults>
</compile_context>

<pallas_src>
import numpy as np

import jax
import jax.numpy as jnp
from jax.experimental import pallas as pl
from jax.experimental.pallas import tpu as pltpu

LANE = 128
SUBLANE = 8


def _round_up(n, m):
    return ((n + m - 1) // m) * m


def _grounder_kernel(x_ref, w1_ref, b1_ref, w2_ref, b2_ref, w3_ref, b3_ref, o_ref):
    # Layer 1: Linear + Tanh.  x cast to bf16 in-kernel; f32 MXU accumulation.
    x = x_ref[...].astype(jnp.bfloat16)
    h1 = jnp.tanh(jnp.dot(x, w1_ref[...], preferred_element_type=jnp.float32)
                  + b1_ref[...])                                  # f32 (TB, Hp)

    # Layer 2: Linear + Softmax over the feature axis (PyTorch Softmax dim=1
    # for 2-D input).  Padded hidden columns of z2 equal b2's pad value
    # (-1e30, pre-baked in the wrapper) since h1 pads are tanh(0)=0 and w2's
    # pad columns are 0, so exp() of them is exactly 0.
    z2 = jnp.dot(h1.astype(jnp.bfloat16), w2_ref[...],
                 preferred_element_type=jnp.float32) + b2_ref[...]
    z2 = z2 - jnp.max(z2, axis=-1, keepdims=True)
    e = jnp.exp(z2)
    p = e / jnp.sum(e, axis=-1, keepdims=True)                    # exact normalization

    # Layer 3: Linear (output columns are NOT padded -> store only real cols).
    out = jnp.dot(p.astype(jnp.bfloat16), w3_ref[...],
                  preferred_element_type=jnp.float32) + b3_ref[...]
    o_ref[...] = out.astype(o_ref.dtype)


def prepare_params(params):
    """One-time pad + bf16 cast of the weights (hoisted out of the per-call path)."""
    w1, b1, w2, b2, w3, b3 = (params[k] for k in ("w1", "b1", "w2", "b2", "w3", "b3"))
    num_inputs, hidden = w1.shape
    num_output = w3.shape[1]
    Hp = _round_up(hidden, LANE)  # lane-dense hidden width

    def pad_w(w, rows, cols):
        w = w.astype(jnp.bfloat16)
        return jnp.pad(w, ((0, rows - w.shape[0]), (0, cols - w.shape[1])))

    w1p = pad_w(w1, num_inputs, Hp)
    w2p = pad_w(w2, Hp, Hp)
    w3p = pad_w(w3, Hp, num_output)                  # keep true output width

    b1p = jnp.pad(b1.astype(jnp.float32), ((0, 0), (0, Hp - hidden)))
    # Pre-bake the softmax mask: padded hidden columns get -1e30 so they
    # contribute 0 to the softmax sum (no in-kernel masking needed).
    b2p = jnp.pad(b2.astype(jnp.float32), ((0, 0), (0, Hp - hidden)),
                  constant_values=-1e30)
    b3p = b3.astype(jnp.float32)
    return dict(w1=w1p, b1=b1p, w2=w2p, b2=b2p, w3=w3p, b3=b3p)


def linear_grounder_no_dropout(x, prepared, *, block_b=512):
    """x: (B, num_inputs) float32.  prepared: output of prepare_params()."""
    w1p, b1p, w2p, b2p, w3p, b3p = (prepared[k]
                                    for k in ("w1", "b1", "w2", "b2", "w3", "b3"))
    B, num_inputs = x.shape
    Hp = w1p.shape[1]
    num_output = w3p.shape[1]

    # Batch tile: multiple of 8 (sublane rule), capped so the grid has >= 2
    # steps when possible (keeps both v7x TensorCores busy).  No batch padding:
    # Pallas masks the ragged last block's loads/stores.
    TB = max(SUBLANE, min(_round_up(block_b, SUBLANE),
                          _round_up(pl.cdiv(B, 2), SUBLANE)))
    grid_b = pl.cdiv(B, TB)

    def const2d(a):  # same block every grid step -> stays VMEM-resident
        return pl.BlockSpec(a.shape, lambda i: (0, 0))

    # Advisory cost estimate so XLA can overlap this small call with neighbors.
    weight_bytes = sum(int(a.size) * a.dtype.itemsize
                       for a in (w1p, b1p, w2p, b2p, w3p, b3p))
    cost = pl.CostEstimate(
        flops=2 * B * (num_inputs * Hp + Hp * Hp + Hp * num_output),
        transcendentals=2 * B * Hp,                       # tanh + exp
        bytes_accessed=int(x.size) * x.dtype.itemsize
                       + B * num_output * 4 + weight_bytes)

    # Explicit scoped-VMEM budget (v5e defaults to only 16 MiB): double-buffered
    # residents + x/out tiles + f32 intermediates, with generous slack.
    vmem_estimate = (2 * weight_bytes
                     + 2 * TB * (num_inputs * 4 + num_output * 4)
                     + 10 * TB * Hp * 4)
    vmem_limit = int(min(max(2 * vmem_estimate, 16 << 20), 60 << 20))

    return pl.pallas_call(
        _grounder_kernel,
        out_shape=jax.ShapeDtypeStruct((B, num_output), jnp.float32),
        grid=(grid_b,),
        in_specs=[
            pl.BlockSpec((TB, num_inputs), lambda i: (i, 0)),   # x tile (f32), pipelined
            const2d(w1p), const2d(b1p),
            const2d(w2p), const2d(b2p),
            const2d(w3p), const2d(b3p),
        ],
        out_specs=pl.BlockSpec((TB, num_output), lambda i: (i, 0)),
        compiler_params=pltpu.CompilerParams(
            dimension_semantics=("parallel",),
            vmem_limit_bytes=vmem_limit),
        cost_estimate=cost,
    )(x, w1p, b1p, w2p, b2p, w3p, b3p)


def init_params(key, num_inputs, hidden_size, num_output, dtype=jnp.float32):
    """PyTorch nn.Linear-style init: uniform(-1/sqrt(fan_in), +1/sqrt(fan_in))."""
    ks = jax.random.split(key, 6)

    def lin(kw, kb, fan_in, fan_out):
        bound = 1.0 / np.sqrt(fan_in)
        w = jax.random.uniform(kw, (fan_in, fan_out), dtype, -bound, bound)  # (in,out)
        b = jax.random.uniform(kb, (1, fan_out), dtype, -bound, bound)
        return w, b

    w1, b1 = lin(ks[0], ks[1], num_inputs, hidden_size)
    w2, b2 = lin(ks[2], ks[3], hidden_size, hidden_size)
    w3, b3 = lin(ks[4], ks[5], hidden_size, num_output)
    return dict(w1=w1, b1=b1, w2=w2, b2=b2, w3=w3, b3=b3)


def _reference(x, p):
    """Pure-JAX reference mirroring the kernel's bf16-operand / f32-accumulate
    matmuls, isolating kernel correctness from the intentional precision choice."""
    bf = jnp.bfloat16
    w1, w2, w3 = (p[k].astype(bf) for k in ("w1", "w2", "w3"))
    h1 = jnp.tanh(jnp.dot(x.astype(bf), w1, preferred_element_type=jnp.float32) + p["b1"])
    z2 = jnp.dot(h1.astype(bf), w2, preferred_element_type=jnp.float32) + p["b2"]
    s = jax.nn.softmax(z2, axis=-1)
    return jnp.dot(s.astype(bf), w3, preferred_element_type=jnp.float32) + p["b3"]


if __name__ == "__main__":
    num_inputs, hidden_size, num_output = 32, 32, 16

    key = jax.random.PRNGKey(0)
    kx, kp = jax.random.split(key)
    params = init_params(kp, num_inputs, hidden_size, num_output)
    prepared = prepare_params(params)   # pad/cast weights once, outside the call path

    # batch=512: even split across 2 grid steps.  batch=131: exercises the
    # ragged last block (no wrapper padding, masked boundary stores).
    for batch in (512, 131):
        x = jax.random.normal(jax.random.fold_in(kx, batch),
                              (batch, num_inputs), jnp.float32)
        out = jax.block_until_ready(linear_grounder_no_dropout(x, prepared))
        ref = jax.block_until_ready(_reference(x, params))
        np.testing.assert_allclose(np.asarray(out), np.asarray(ref),
                                   rtol=5e-3, atol=5e-3)

    print("KERNEL_OK")
</pallas_src>

<mosaic_0001>
module attributes {stable_mosaic.version = 11 : i64} {
  func.func @_grounder_kernel(%arg0: i32, %arg1: memref<256x32xf32, #tpu.memory_space<vmem>>, %arg2: memref<32x128xbf16, #tpu.memory_space<vmem>>, %arg3: memref<1x128xf32, #tpu.memory_space<vmem>>, %arg4: memref<128x128xbf16, #tpu.memory_space<vmem>>, %arg5: memref<1x128xf32, #tpu.memory_space<vmem>>, %arg6: memref<128x16xbf16, #tpu.memory_space<vmem>>, %arg7: memref<1x16xf32, #tpu.memory_space<vmem>>, %arg8: memref<256x16xf32, #tpu.memory_space<vmem>>) attributes {dimension_semantics = [#tpu.dimension_semantics<parallel>], iteration_bounds = array<i64: 2>, scalar_prefetch = 0 : i64, scratch_operands = 0 : i64, tpu.core_type = #tpu.core_type<tc>, window_params = [{transform_indices = @transform_0, window_bounds = array<i64: 256, 32>}, {pipeline_mode = #tpu.pipeline_mode<synchronous>, transform_indices = @transform_1, window_bounds = array<i64: 32, 128>}, {pipeline_mode = #tpu.pipeline_mode<synchronous>, transform_indices = @transform_2, window_bounds = array<i64: 1, 128>}, {pipeline_mode = #tpu.pipeline_mode<synchronous>, transform_indices = @transform_3, window_bounds = array<i64: 128, 128>}, {pipeline_mode = #tpu.pipeline_mode<synchronous>, transform_indices = @transform_4, window_bounds = array<i64: 1, 128>}, {pipeline_mode = #tpu.pipeline_mode<synchronous>, transform_indices = @transform_5, window_bounds = array<i64: 128, 16>}, {pipeline_mode = #tpu.pipeline_mode<synchronous>, transform_indices = @transform_6, window_bounds = array<i64: 1, 16>}, {transform_indices = @transform_7, window_bounds = array<i64: 256, 16>}]} {
    %c0 = arith.constant 0 : index
    %c0_0 = arith.constant 0 : index
    %0 = vector.load %arg1[%c0, %c0_0] : memref<256x32xf32, #tpu.memory_space<vmem>>, vector<256x32xf32>
    %1 = arith.truncf %0 : vector<256x32xf32> to vector<256x32xbf16>
    %c0_1 = arith.constant 0 : index
    %c0_2 = arith.constant 0 : index
    %2 = vector.load %arg2[%c0_1, %c0_2] : memref<32x128xbf16, #tpu.memory_space<vmem>>, vector<32x128xbf16>
    %cst = arith.constant dense<0.000000e+00> : vector<256x128xf32>
    %3 = tpu.matmul %1, %2, %cst {dimension_numbers = #tpu.dot_dimension_numbers<[1], [0], [0], [1], [0, 0, 1, 1], [], []>} : vector<256x32xbf16>, vector<32x128xbf16>, vector<256x128xf32> -> vector<256x128xf32>
    %c0_3 = arith.constant 0 : index
    %c0_4 = arith.constant 0 : index
    %4 = vector.load %arg3[%c0_3, %c0_4] : memref<1x128xf32, #tpu.memory_space<vmem>>, vector<1x128xf32>
    %5 = vector.broadcast %4 : vector<1x128xf32> to vector<256x128xf32>
    %6 = arith.addf %3, %5 : vector<256x128xf32>
    %7 = math.tanh %6 : vector<256x128xf32>
    %8 = arith.truncf %7 : vector<256x128xf32> to vector<256x128xbf16>
    %c0_5 = arith.constant 0 : index
    %c0_6 = arith.constant 0 : index
    %9 = vector.load %arg4[%c0_5, %c0_6] : memref<128x128xbf16, #tpu.memory_space<vmem>>, vector<128x128xbf16>
    %cst_7 = arith.constant dense<0.000000e+00> : vector<256x128xf32>
    %10 = tpu.matmul %8, %9, %cst_7 {dimension_numbers = #tpu.dot_dimension_numbers<[1], [0], [0], [1], [0, 0, 1, 1], [], []>} : vector<256x128xbf16>, vector<128x128xbf16>, vector<256x128xf32> -> vector<256x128xf32>
    %c0_8 = arith.constant 0 : index
    %c0_9 = arith.constant 0 : index
    %11 = vector.load %arg5[%c0_8, %c0_9] : memref<1x128xf32, #tpu.memory_space<vmem>>, vector<1x128xf32>
    %12 = vector.broadcast %11 : vector<1x128xf32> to vector<256x128xf32>
    %13 = arith.addf %10, %12 : vector<256x128xf32>
    %cst_10 = arith.constant dense<0xFF800000> : vector<256xf32>
    %14 = vector.multi_reduction <maximumf>, %13, %cst_10 [1] : vector<256x128xf32> to vector<256xf32>
    %15 = vector.shape_cast %14 : vector<256xf32> to vector<256x1xf32>
    %16 = vector.broadcast %15 : vector<256x1xf32> to vector<256x128xf32>
    %17 = arith.subf %13, %16 : vector<256x128xf32>
    %18 = math.exp %17 : vector<256x128xf32>
    %cst_11 = arith.constant dense<0.000000e+00> : vector<256xf32>
    %19 = vector.multi_reduction <add>, %18, %cst_11 [1] : vector<256x128xf32> to vector<256xf32>
    %20 = vector.shape_cast %19 : vector<256xf32> to vector<256x1xf32>
    %21 = vector.broadcast %20 : vector<256x1xf32> to vector<256x128xf32>
    %22 = arith.divf %18, %21 : vector<256x128xf32>
    %23 = arith.truncf %22 : vector<256x128xf32> to vector<256x128xbf16>
    %c0_12 = arith.constant 0 : index
    %c0_13 = arith.constant 0 : index
    %24 = vector.load %arg6[%c0_12, %c0_13] : memref<128x16xbf16, #tpu.memory_space<vmem>>, vector<128x16xbf16>
    %cst_14 = arith.constant dense<0.000000e+00> : vector<256x16xf32>
    %25 = tpu.matmul %23, %24, %cst_14 {dimension_numbers = #tpu.dot_dimension_numbers<[1], [0], [0], [1], [0, 0, 1, 1], [], []>} : vector<256x128xbf16>, vector<128x16xbf16>, vector<256x16xf32> -> vector<256x16xf32>
    %c0_15 = arith.constant 0 : index
    %c0_16 = arith.constant 0 : index
    %26 = vector.load %arg7[%c0_15, %c0_16] : memref<1x16xf32, #tpu.memory_space<vmem>>, vector<1x16xf32>
    %27 = vector.broadcast %26 : vector<1x16xf32> to vector<256x16xf32>
    %28 = arith.addf %25, %27 : vector<256x16xf32>
    %c0_17 = arith.constant 0 : index
    %c0_18 = arith.constant 0 : index
    %29 = vector.load %arg8[%c0_17, %c0_18] : memref<256x16xf32, #tpu.memory_space<vmem>>, vector<256x16xf32>
    tpu.vector_store %arg8[%c0_17, %c0_18], %28 {strides = array<i32>} : memref<256x16xf32, #tpu.memory_space<vmem>>, vector<256x16xf32>,
    return
  }
  func.func @transform_0(%arg0: i32) -> (i32, i32) {
    %c0_i32 = arith.constant 0 : i32
    %c0_i32_0 = arith.constant 0 : i32
    return %arg0, %c0_i32 : i32, i32
  }
  func.func @transform_1(%arg0: i32) -> (i32, i32) {
    %c0_i32 = arith.constant 0 : i32
    %c0_i32_0 = arith.constant 0 : i32
    %c0_i32_1 = arith.constant 0 : i32
    return %c0_i32, %c0_i32_0 : i32, i32
  }
  func.func @transform_2(%arg0: i32) -> (i32, i32) {
    %c0_i32 = arith.constant 0 : i32
    %c0_i32_0 = arith.constant 0 : i32
    %c0_i32_1 = arith.constant 0 : i32
    return %c0_i32, %c0_i32_0 : i32, i32
  }
  func.func @transform_3(%arg0: i32) -> (i32, i32) {
    %c0_i32 = arith.constant 0 : i32
    %c0_i32_0 = arith.constant 0 : i32
    %c0_i32_1 = arith.constant 0 : i32
    return %c0_i32, %c0_i32_0 : i32, i32
  }
  func.func @transform_4(%arg0: i32) -> (i32, i32) {
    %c0_i32 = arith.constant 0 : i32
    %c0_i32_0 = arith.constant 0 : i32
    %c0_i32_1 = arith.constant 0 : i32
    return %c0_i32, %c0_i32_0 : i32, i32
  }
  func.func @transform_5(%arg0: i32) -> (i32, i32) {
    %c0_i32 = arith.constant 0 : i32
    %c0_i32_0 = arith.constant 0 : i32
    %c0_i32_1 = arith.constant 0 : i32
    return %c0_i32, %c0_i32_0 : i32, i32
  }
  func.func @transform_6(%arg0: i32) -> (i32, i32) {
    %c0_i32 = arith.constant 0 : i32
    %c0_i32_0 = arith.constant 0 : i32
    %c0_i32_1 = arith.constant 0 : i32
    return %c0_i32, %c0_i32_0 : i32, i32
  }
  func.func @transform_7(%arg0: i32) -> (i32, i32) {
    %c0_i32 = arith.constant 0 : i32
    %c0_i32_0 = arith.constant 0 : i32
    return %arg0, %c0_i32 : i32, i32
  }
}

</mosaic_0001>

<llo_original>
// kernel: tpu_custom_call.1
$region0: #{tpu_custom_call.1}
  #allocation0 [shape = 'u32[]', space=smem, size = 0x4, offset = 0x4, fixed_abs, tag = 'smem constant byte address 0x4 - core index']
  #allocation1 [shape = 'u32[144,128]{1,0:T(1,128)}', space=vmem, size = 0x12000, scoped, tag = 'internal scratch']
  %s0 = inlined_call_operand.vmem [shape: f32[512,32], index: 0, kind: input, shape index: {}]
  %s1 = inlined_call_operand.vmem [shape: bf16[32,128], index: 1, kind: input, shape index: {}]
  %s2 = inlined_call_operand.vmem [shape: f32[1,128], index: 2, kind: input, shape index: {}]
  %s3 = inlined_call_operand.vmem [shape: bf16[128,128], index: 3, kind: input, shape index: {}]
  %s4 = inlined_call_operand.vmem [shape: f32[1,128], index: 4, kind: input, shape index: {}]
  %s5 = inlined_call_operand.vmem [shape: bf16[128,16], index: 5, kind: input, shape index: {}]
  %s6 = inlined_call_operand.vmem [shape: f32[1,16], index: 6, kind: input, shape index: {}]
  %s7 = inlined_call_operand.vmem [shape: f32[512,16], index: 7, kind: output, shape index: {}]
  %s8 = sld [smem:[#allocation0]]
  $region61: #{tpu_custom_call.1} parent=0
    _
  %s10 = ssub.s32 1, %s8
  %s11 = scalar_select 0, %s10, %s8
  loop: start=0, step=1, limit=4
  $region2: #{tpu_custom_call.1} parent=0 // loop_pre_header
    _
  $region3: #{tpu_custom_call.1} parent=0 // loop_header
    %s13 = sphi 0, %s17
    %p14 = scmp.ge.s32.totalorder %s13, 4
    %s23 = sphi 0, %s25
    %s26 = sphi 0, %s23
    %s27 = sphi 0, %s26
    %s43 = sphi 0, %s27
    %s47 = sphi 0, %s47
    %s49 = sphi 0, %s47
    %s50 = sphi 0, %s49
    %s64 = sphi 0, %s50
    %s68 = sphi 0, %s68
    %s70 = sphi 0, %s68
    %s71 = sphi 0, %s70
    %s85 = sphi 0, %s71
    %s89 = sphi 0, %s89
    %s91 = sphi 0, %s89
    %s92 = sphi 0, %s91
    %s106 = sphi 0, %s92
    %s110 = sphi 0, %s110
    %s112 = sphi 0, %s110
    %s113 = sphi 0, %s112
    %s127 = sphi 0, %s113
    %s131 = sphi 0, %s131
    %s133 = sphi 0, %s131
    %s134 = sphi 0, %s133
    %s148 = sphi 0, %s134
    %s152 = sphi 0, %s152
    %s154 = sphi 0, %s152
    %s155 = sphi 0, %s154
    %s169 = sphi 0, %s155
    %s175 = sphi 0, %s177
    %s178 = sphi 0, %s175
    %s179 = sphi 0, %s178
    %s195 = sphi 0, %s179
  $region4: #{tpu_custom_call.1} parent=0 // loop_header_branch
    %16 = sbr.rel (%p14) target = $region8
  $region5: #{tpu_custom_call.1} parent=0 // loop_body
    %s18 = ssub.s32 %s13, 1
    %s19 = ssub.s32 %s13, 2
    %s20 = sadd.s32 %s13, 1
    %s21 = ssub.s32 %s13, %s20
    %p22 = scmp.eq.s32.totalorder %s21, 0
    %s24 = sadd.s32 %s23, 1
    %s25 = scalar_select %p22, %s23, %s24
    %p28 = pneg %p22
    %p29 = scmp.eq.s32.totalorder %s13, 1
    %p30 = por %p28, %p29
    %p31 = scmp.ne.s32.totalorder %s23, %s26
    %p32 = scmp.eq.s32.totalorder %s13, 0
    %p33 = por %p31, %p32
    %p34 = scmp.ne.s32.totalorder %s23, %s26
    %p35 = scmp.eq.s32.totalorder %s18, 1
    %p36 = por %p34, %p35
    %p37 = scmp.ne.s32.totalorder %s26, %s27
    %p38 = scmp.eq.s32.totalorder %s18, 0
    %p39 = por %p37, %p38
    %p40 = scmp.ne.s32.totalorder %s26, %s27
    %p41 = scmp.eq.s32.totalorder %s19, 1
    %p42 = por %p40, %p41
    %p44 = scmp.ne.s32.totalorder %s27, %s43
    %p45 = scmp.eq.s32.totalorder %s19, 0
    %p46 = por %p44, %p45
    %s48 = sadd.s32 %s47, 1
    %p51 = scmp.eq.s32.totalorder %s13, 1
    %p52 = scmp.ne.s32.totalorder %s47, %s49
    %p53 = scmp.eq.s32.totalorder %s13, 0
    %p54 = por %p52, %p53
    %p55 = scmp.ne.s32.totalorder %s47, %s49
    %p56 = scmp.eq.s32.totalorder %s18, 1
    %p57 = por %p55, %p56
    %p58 = scmp.ne.s32.totalorder %s49, %s50
    %p59 = scmp.eq.s32.totalorder %s18, 0
    %p60 = por %p58, %p59
    %p61 = scmp.ne.s32.totalorder %s49, %s50
    %p62 = scmp.eq.s32.totalorder %s19, 1
    %p63 = por %p61, %p62
    %p65 = scmp.ne.s32.totalorder %s50, %s64
    %p66 = scmp.eq.s32.totalorder %s19, 0
    %p67 = por %p65, %p66
    %s69 = sadd.s32 %s68, 1
    %p72 = scmp.eq.s32.totalorder %s13, 1
    %p73 = scmp.ne.s32.totalorder %s68, %s70
    %p74 = scmp.eq.s32.totalorder %s13, 0
    %p75 = por %p73, %p74
    %p76 = scmp.ne.s32.totalorder %s68, %s70
    %p77 = scmp.eq.s32.totalorder %s18, 1
    %p78 = por %p76, %p77
    %p79 = scmp.ne.s32.totalorder %s70, %s71
    %p80 = scmp.eq.s32.totalorder %s18, 0
    %p81 = por %p79, %p80
    %p82 = scmp.ne.s32.totalorder %s70, %s71
    %p83 = scmp.eq.s32.totalorder %s19, 1
    %p84 = por %p82, %p83
    %p86 = scmp.ne.s32.totalorder %s71, %s85
    %p87 = scmp.eq.s32.totalorder %s19, 0
    %p88 = por %p86, %p87
    %s90 = sadd.s32 %s89, 1
    %p93 = scmp.eq.s32.totalorder %s13, 1
    %p94 = scmp.ne.s32.totalorder %s89, %s91
    %p95 = scmp.eq.s32.totalorder %s13, 0
    %p96 = por %p94, %p95
    %p97 = scmp.ne.s32.totalorder %s89, %s91
    %p98 = scmp.eq.s32.totalorder %s18, 1
    %p99 = por %p97, %p98
    %p100 = scmp.ne.s32.totalorder %s91, %s92
    %p101 = scmp.eq.s32.totalorder %s18, 0
    %p102 = por %p100, %p101
    %p103 = scmp.ne.s32.totalorder %s91, %s92
    %p104 = scmp.eq.s32.totalorder %s19, 1
    %p105 = por %p103, %p104
    %p107 = scmp.ne.s32.totalorder %s92, %s106
    %p108 = scmp.eq.s32.totalorder %s19, 0
    %p109 = por %p107, %p108
    %s111 = sadd.s32 %s110, 1
    %p114 = scmp.eq.s32.totalorder %s13, 1
    %p115 = scmp.ne.s32.totalorder %s110, %s112
    %p116 = scmp.eq.s32.totalorder %s13, 0
    %p117 = por %p115, %p116
    %p118 = scmp.ne.s32.totalorder %s110, %s112
    %p119 = scmp.eq.s32.totalorder %s18, 1
    %p120 = por %p118, %p119
    %p121 = scmp.ne.s32.totalorder %s112, %s113
    %p122 = scmp.eq.s32.totalorder %s18, 0
    %p123 = por %p121, %p122
    %p124 = scmp.ne.s32.totalorder %s112, %s113
    %p125 = scmp.eq.s32.totalorder %s19, 1
    %p126 = por %p124, %p125
    %p128 = scmp.ne.s32.totalorder %s113, %s127
    %p129 = scmp.eq.s32.totalorder %s19, 0
    %p130 = por %p128, %p129
    %s132 = sadd.s32 %s131, 1
    %p135 = scmp.eq.s32.totalorder %s13, 1
    %p136 = scmp.ne.s32.totalorder %s131, %s133
    %p137 = scmp.eq.s32.totalorder %s13, 0
    %p138 = por %p136, %p137
    %p139 = scmp.ne.s32.totalorder %s131, %s133
    %p140 = scmp.eq.s32.totalorder %s18, 1
    %p141 = por %p139, %p140
    %p142 = scmp.ne.s32.totalorder %s133, %s134
    %p143 = scmp.eq.s32.totalorder %s18, 0
    %p144 = por %p142, %p143
    %p145 = scmp.ne.s32.totalorder %s133, %s134
    %p146 = scmp.eq.s32.totalorder %s19, 1
    %p147 = por %p145, %p146
    %p149 = scmp.ne.s32.totalorder %s134, %s148
    %p150 = scmp.eq.s32.totalorder %s19, 0
    %p151 = por %p149, %p150
    %s153 = sadd.s32 %s152, 1
    %p156 = scmp.eq.s32.totalorder %s13, 1
    %p157 = scmp.ne.s32.totalorder %s152, %s154
    %p158 = scmp.eq.s32.totalorder %s13, 0
    %p159 = por %p157, %p158
    %p160 = scmp.ne.s32.totalorder %s152, %s154
    %p161 = scmp.eq.s32.totalorder %s18, 1
    %p162 = por %p160, %p161
    %p163 = scmp.ne.s32.totalorder %s154, %s155
    %p164 = scmp.eq.s32.totalorder %s18, 0
    %p165 = por %p163, %p164
    %p166 = scmp.ne.s32.totalorder %s154, %s155
    %p167 = scmp.eq.s32.totalorder %s19, 1
    %p168 = por %p166, %p167
    %p170 = scmp.ne.s32.totalorder %s155, %s169
    %p171 = scmp.eq.s32.totalorder %s19, 0
    %p172 = por %p170, %p171
    %s173 = ssub.s32 %s13, %s20
    %p174 = scmp.eq.s32.totalorder %s173, 0
    %s176 = sadd.s32 %s175, 1
    %s177 = scalar_select %p174, %s175, %s176
    %p180 = pneg %p174
    %p181 = scmp.eq.s32.totalorder %s13, 1
    %p182 = por %p180, %p181
    %p183 = scmp.ne.s32.totalorder %s175, %s178
    %p184 = scmp.eq.s32.totalorder %s13, 0
    %p185 = por %p183, %p184
    %p186 = scmp.ne.s32.totalorder %s175, %s178
    %p187 = scmp.eq.s32.totalorder %s18, 1
    %p188 = por %p186, %p187
    %p189 = scmp.ne.s32.totalorder %s178, %s179
    %p190 = scmp.eq.s32.totalorder %s18, 0
    %p191 = por %p189, %p190
    %p192 = scmp.ne.s32.totalorder %s178, %s179
    %p193 = scmp.eq.s32.totalorder %s19, 1
    %p194 = por %p192, %p193
    %p196 = scmp.ne.s32.totalorder %s179, %s195
    %p197 = scmp.eq.s32.totalorder %s19, 0
    %p198 = por %p196, %p197
    %p199 = scmp.le.s32.totalorder 1, %s13
    %p200 = scmp.lt.s32.totalorder %s13, 3
    %p201 = pnand %p199, %p200
    %p202 = pneg %p201
    // Predicated region
    $region9: #{tpu_custom_call.1} parent=5 // pred_check
      _
    $region10: #{tpu_custom_call.1} parent=5 // pred_check_branch
      %204 = sbr.rel (%p201) target = $region12
    $region11: #{tpu_custom_call.1} parent=5 // pred_region
      %s205 = ssub.s32 %s13, 1
      // Predicated region
      $region13: #{tpu_custom_call.1} parent=11 // pred_check
        %p206 = pneg %p60
      $region14: #{tpu_custom_call.1} parent=11 // pred_check_branch
        %208 = sbr.rel (%p206) target = $region16
      $region15: #{tpu_custom_call.1} parent=11 // pred_region
        _
      $region16: #{tpu_custom_call.1} parent=11 // pred_fallthru
        _
      // Predicated region
      $region17: #{tpu_custom_call.1} parent=11 // pred_check
        %p209 = pneg %p81
      $region18: #{tpu_custom_call.1} parent=11 // pred_check_branch
        %211 = sbr.rel (%p209) target = $region20
      $region19: #{tpu_custom_call.1} parent=11 // pred_region
        _
      $region20: #{tpu_custom_call.1} parent=11 // pred_fallthru
        _
      // Predicated region
      $region21: #{tpu_custom_call.1} parent=11 // pred_check
        %p212 = pneg %p102
      $region22: #{tpu_custom_call.1} parent=11 // pred_check_branch
        %214 = sbr.rel (%p212) target = $region24
      $region23: #{tpu_custom_call.1} parent=11 // pred_region
        _
      $region24: #{tpu_custom_call.1} parent=11 // pred_fallthru
        _
      // Predicated region
      $region25: #{tpu_custom_call.1} parent=11 // pred_check
        %p215 = pneg %p123
      $region26: #{tpu_custom_call.1} parent=11 // pred_check_branch
        %217 = sbr.rel (%p215) target = $region28
      $region27: #{tpu_custom_call.1} parent=11 // pred_region
        _
      $region28: #{tpu_custom_call.1} parent=11 // pred_fallthru
        _
      // Predicated region
      $region29: #{tpu_custom_call.1} parent=11 // pred_check
        %p218 = pneg %p144
      $region30: #{tpu_custom_call.1} parent=11 // pred_check_branch
        %220 = sbr.rel (%p218) target = $region32
      $region31: #{tpu_custom_call.1} parent=11 // pred_region
        _
      $region32: #{tpu_custom_call.1} parent=11 // pred_fallthru
        _
      // Predicated region
      $region33: #{tpu_custom_call.1} parent=11 // pred_check
        %p221 = pneg %p165
      $region34: #{tpu_custom_call.1} parent=11 // pred_check_branch
        %223 = sbr.rel (%p221) target = $region36
      $region35: #{tpu_custom_call.1} parent=11 // pred_region
        _
      $region36: #{tpu_custom_call.1} parent=11 // pred_fallthru
        _
    $region12: #{tpu_custom_call.1} parent=5 // pred_fallthru
      _
    %p224 = scmp.lt.s32.totalorder %s13, 2
    // Predicated region
    $region37: #{tpu_custom_call.1} parent=5 // pred_check
      %p225 = pneg %p224
    $region38: #{tpu_custom_call.1} parent=5 // pred_check_branch
      %227 = sbr.rel (%p225) target = $region40
    $region39: #{tpu_custom_call.1} parent=5 // pred_region
      // Predicated region
      $region41: #{tpu_custom_call.1} parent=39 // pred_check
        %p228 = pneg %p33
      $region42: #{tpu_custom_call.1} parent=39 // pred_check_branch
        %230 = sbr.rel (%p228) target = $region44
      $region43: #{tpu_custom_call.1} parent=39 // pred_region
        %s231 = smul.u32 32, %s13
        %p232 = scmp.lt.s32.totalorder %s231, 63
        %s233 = scalar_select %p232, %s231, 63
        %s234 = smul.addr %s233, 8
        %s235 = scalar_lea.vmem %s0, %s234
        %s236 = smul.u32 32, %s13
      $region44: #{tpu_custom_call.1} parent=39 // pred_fallthru
        _
    $region40: #{tpu_custom_call.1} parent=5 // pred_fallthru
      _
    %p237 = scmp.le.s32.totalorder 1, %s13
    %p238 = scmp.lt.s32.totalorder %s13, 3
    %p239 = pnand %p237, %p238
    %p240 = pneg %p239
    // Predicated region
    $region45: #{tpu_custom_call.1} parent=5 // pred_check
      _
    $region46: #{tpu_custom_call.1} parent=5 // pred_check_branch
      %242 = sbr.rel (%p239) target = $region48
    $region47: #{tpu_custom_call.1} parent=5 // pred_region
      %s243 = ssub.s32 %s13, 1
      %s244 = smul.u32 32, %s18
      %p245 = scmp.lt.s32.totalorder %s244, 63
      %s246 = scalar_select %p245, %s244, 63
      %s247 = smul.addr %s246, 8
      %s248 = scalar_lea.vmem %s0, %s247
      %p249 = pneg %p39
      %p250 = pneg %p36
      %p251 = pneg %p60
      %p252 = pneg %p57
      %p253 = pneg %p81
      %p254 = pneg %p78
      %p255 = pneg %p102
      %p256 = pneg %p99
      %p257 = pneg %p123
      %p258 = pneg %p120
      %p259 = pneg %p144
      %p260 = pneg %p141
      %p261 = pneg %p165
      %p262 = pneg %p162
      %p263 = pneg %p191
      %p264 = pneg %p188
      %s265 = smul.u32 32, %s18
      %p266 = scmp.lt.s32.totalorder %s265, 63
      %s267 = scalar_select %p266, %s265, 63
      %s268 = smul.addr %s267, 8
      %s269 = scalar_lea.vmem %s7, %s268
      %s270 = smul.u32 32, %s18
      %p271 = scmp.lt.s32.totalorder %s270, 63
      %s272 = scalar_select %p271, %s270, 63
      %s273 = smul.addr %s272, 8
      %s274 = scalar_lea.vmem %s0, %s273
      %s275 = smul.u32 32, %s18
      %s276 = smul.u32 32, %s18
      %p277 = scmp.lt.s32.totalorder %s276, 63
      %s278 = scalar_select %p277, %s276, 63
      %s279 = smul.addr %s278, 8
      %s280 = scalar_lea.vmem %s7, %s279
      %s281 = smul.u32 32, %s18
      %v283 = vld [vmem:[%s274] sm:$0xff]
      %v284 = vld [vmem:[%s274 + $0x8] sm:$0xff]
      %v285 = vld [vmem:[%s274 + $0x10] sm:$0xff]
      %v286 = vld [vmem:[%s274 + $0x18] sm:$0xff]
      %v287 = vld [vmem:[%s274 + $0x20] sm:$0xff]
      %v288 = vld [vmem:[%s274 + $0x28] sm:$0xff]
      %v289 = vld [vmem:[%s274 + $0x30] sm:$0xff]
      %v290 = vld [vmem:[%s274 + $0x38] sm:$0xff]
      %v291 = vld [vmem:[%s274 + $0x40] sm:$0xff]
      %v292 = vld [vmem:[%s274 + $0x48] sm:$0xff]
      %v293 = vld [vmem:[%s274 + $0x50] sm:$0xff]
      %v294 = vld [vmem:[%s274 + $0x58] sm:$0xff]
      %v295 = vld [vmem:[%s274 + $0x60] sm:$0xff]
      %v296 = vld [vmem:[%s274 + $0x68] sm:$0xff]
      %v297 = vld [vmem:[%s274 + $0x70] sm:$0xff]
      %v298 = vld [vmem:[%s274 + $0x78] sm:$0xff]
      %v299 = vld [vmem:[%s274 + $0x80] sm:$0xff]
      %v300 = vld [vmem:[%s274 + $0x88] sm:$0xff]
      %v301 = vld [vmem:[%s274 + $0x90] sm:$0xff]
      %v302 = vld [vmem:[%s274 + $0x98] sm:$0xff]
      %v303 = vld [vmem:[%s274 + $0xa0] sm:$0xff]
      %v304 = vld [vmem:[%s274 + $0xa8] sm:$0xff]
      %v305 = vld [vmem:[%s274 + $0xb0] sm:$0xff]
      %v306 = vld [vmem:[%s274 + $0xb8] sm:$0xff]
      %v307 = vld [vmem:[%s274 + $0xc0] sm:$0xff]
      %v308 = vld [vmem:[%s274 + $0xc8] sm:$0xff]
      %v309 = vld [vmem:[%s274 + $0xd0] sm:$0xff]
      %v310 = vld [vmem:[%s274 + $0xd8] sm:$0xff]
      %v311 = vld [vmem:[%s274 + $0xe0] sm:$0xff]
      %v312 = vld [vmem:[%s274 + $0xe8] sm:$0xff]
      %v313 = vld [vmem:[%s274 + $0xf0] sm:$0xff]
      %v314 = vld [vmem:[%s274 + $0xf8] sm:$0xff]
      %v315 = vpack.c.bf16 %v284, %v283
      %v316 = vpack.c.bf16 %v286, %v285
      %v317 = vpack.c.bf16 %v288, %v287
      %v318 = vpack.c.bf16 %v290, %v289
      %v319 = vpack.c.bf16 %v292, %v291
      %v320 = vpack.c.bf16 %v294, %v293
      %v321 = vpack.c.bf16 %v296, %v295
      %v322 = vpack.c.bf16 %v298, %v297
      %v323 = vpack.c.bf16 %v300, %v299
      %v324 = vpack.c.bf16 %v302, %v301
      %v325 = vpack.c.bf16 %v304, %v303
      %v326 = vpack.c.bf16 %v306, %v305
      %v327 = vpack.c.bf16 %v308, %v307
      %v328 = vpack.c.bf16 %v310, %v309
      %v329 = vpack.c.bf16 %v312, %v311
      %v330 = vpack.c.bf16 %v314, %v313
      %v331 = vld [vmem:[%s1] sm:$0xf]
      %v332 = vld [vmem:[%s1 + $0x4] sm:$0xf]
      %v333 = vld [vmem:[%s1 + $0x8] sm:$0xf]
      %v334 = vld [vmem:[%s1 + $0xc] sm:$0xf]
      %v335 = vld [vmem:[%s2] sm:$0x1]
      %v337 = vlaneseq
      %v338 = vshrl.u32 %v337, 7
      %v339 = vsub.s32 0, %v338
      %v340 = vrot.slane %v335, %v339
      %v346 = vunpack.c.l.b16 %v331
      %v347 = vunpack.c.l.b16 %v332
      %v348 = vunpack.c.l.b16 %v333
      %v349 = vunpack.c.l.b16 %v334
      %v350 = vpack.c.b16 %v347, %v346
      %v351 = vpack.c.b16 %v349, %v348
      %vm354 = vcmask 261120
      %v356 = vsel %vm354, %v315, 0
      %v359 = vsel %vm354, %v316, 0
      %v362 = vsel %vm354, %v317, 0
      %v365 = vsel %vm354, %v318, 0
      %v368 = vsel %vm354, %v319, 0
      %v371 = vsel %vm354, %v320, 0
      %v374 = vsel %vm354, %v321, 0
      %v377 = vsel %vm354, %v322, 0
      %v380 = vsel %vm354, %v323, 0
      %v383 = vsel %vm354, %v324, 0
      %v386 = vsel %vm354, %v325, 0
      %v389 = vsel %vm354, %v326, 0
      %v392 = vsel %vm354, %v327, 0
      %v395 = vsel %vm354, %v328, 0
      %v398 = vsel %vm354, %v329, 0
      %v401 = vsel %vm354, %v330, 0
      %403 = vmatprep.subr.bf16.mxu0 0
      %404 = vmatpush1.bf16.msra.mxu0 %v350
      %405 = vmatprep.subr.bf16.mxu0 0
      %406 = vmatpush1.bf16.msra.mxu0 %v351
      %407 = vmatprep.subr.bf16.mxu0 0
      %408 = vmatpush1.bf16.msra.mxu0 0
      %409 = vmatprep.subr.bf16.mxu0 0
      %410 = vmatpush1.bf16.msra.mxu0 0
      %411 = vmatprep.subr.bf16.mxu0 0
      %412 = vmatpush1.bf16.msra.mxu0 0
      %413 = vmatprep.subr.bf16.mxu0 0
      %414 = vmatpush1.bf16.msra.mxu0 0
      %415 = vmatprep.subr.bf16.mxu0 0
      %416 = vmatpush1.bf16.msra.mxu0 0
      %417 = vmatprep.subr.bf16.mxu0 0
      %418 = vmatpush1.bf16.msra.mxu0 0
      %419 = vmatprep.subr.bf16.mxu0 0
      %420 = vmatpush1.bf16.msra.mxu0 0
      %421 = vmatprep.subr.bf16.mxu0 0
      %422 = vmatpush1.bf16.msra.mxu0 0
      %423 = vmatprep.subr.bf16.mxu0 0
      %424 = vmatpush1.bf16.msra.mxu0 0
      %425 = vmatprep.subr.bf16.mxu0 0
      %426 = vmatpush1.bf16.msra.mxu0 0
      %427 = vmatprep.subr.bf16.mxu0 0
      %428 = vmatpush1.bf16.msra.mxu0 0
      %429 = vmatprep.subr.bf16.mxu0 0
      %430 = vmatpush1.bf16.msra.mxu0 0
      %431 = vmatprep.subr.bf16.mxu0 0
      %432 = vmatpush1.bf16.msra.mxu0 0
      %433 = vmatprep.subr.bf16.mxu0 0
      %434 = vmatpush1.bf16.msra.mxu0 0
      %435 = vmatprep.mubr.bf16.mxu0 0
      %436 = vmatmul.mubr.bf16.gmra.mrb[0].mxu0 %v356
      %v437 = vpop.f32.mrb[0].mxu0
      %v438 = vadd.f32 %v340, %v437
      %v439 = vpop.f32.mrb[0].mxu0
      %v440 = vpop.f32.mrb[0].mxu0
      %v441 = vadd.f32 %v340, %v440
      %v442 = vpop.f32.mrb[0].mxu0
      %443 = vmatprep.mubr.bf16.mxu0 0
      %444 = vmatmul.mubr.bf16.gmra.mrb[0].mxu0 %v359
      %v445 = vpop.f32.mrb[0].mxu0
      %v446 = vadd.f32 %v340, %v445
      %v447 = vpop.f32.mrb[0].mxu0
      %v448 = vpop.f32.mrb[0].mxu0
      %v449 = vadd.f32 %v340, %v448
      %v450 = vpop.f32.mrb[0].mxu0
      %451 = vmatprep.mubr.bf16.mxu0 0
      %452 = vmatmul.mubr.bf16.gmra.mrb[0].mxu0 %v362
      %v453 = vpop.f32.mrb[0].mxu0
      %v454 = vadd.f32 %v340, %v453
      %v455 = vpop.f32.mrb[0].mxu0
      %v456 = vpop.f32.mrb[0].mxu0
      %v457 = vadd.f32 %v340, %v456
      %v458 = vpop.f32.mrb[0].mxu0
      %459 = vmatprep.mubr.bf16.mxu0 0
      %460 = vmatmul.mubr.bf16.gmra.mrb[0].mxu0 %v365
      %v461 = vpop.f32.mrb[0].mxu0
      %v462 = vadd.f32 %v340, %v461
      %v463 = vpop.f32.mrb[0].mxu0
      %v464 = vpop.f32.mrb[0].mxu0
      %v465 = vadd.f32 %v340, %v464
      %v466 = vpop.f32.mrb[0].mxu0
      %467 = vmatprep.mubr.bf16.mxu0 0
      %468 = vmatmul.mubr.bf16.gmra.mrb[0].mxu0 %v368
      %v469 = vpop.f32.mrb[0].mxu0
      %v470 = vadd.f32 %v340, %v469
      %v471 = vpop.f32.mrb[0].mxu0
      %v472 = vpop.f32.mrb[0].mxu0
      %v473 = vadd.f32 %v340, %v472
      %v474 = vpop.f32.mrb[0].mxu0
      %475 = vmatprep.mubr.bf16.mxu0 0
      %476 = vmatmul.mubr.bf16.gmra.mrb[0].mxu0 %v371
      %v477 = vpop.f32.mrb[0].mxu0
      %v478 = vadd.f32 %v340, %v477
      %v479 = vpop.f32.mrb[0].mxu0
      %v480 = vpop.f32.mrb[0].mxu0
      %v481 = vadd.f32 %v340, %v480
      %v482 = vpop.f32.mrb[0].mxu0
      %483 = vmatprep.mubr.bf16.mxu0 0
      %484 = vmatmul.mubr.bf16.gmra.mrb[0].mxu0 %v374
      %v485 = vpop.f32.mrb[0].mxu0
      %v486 = vadd.f32 %v340, %v485
      %v487 = vpop.f32.mrb[0].mxu0
      %v488 = vpop.f32.mrb[0].mxu0
      %v489 = vadd.f32 %v340, %v488
      %v490 = vpop.f32.mrb[0].mxu0
      %491 = vmatprep.mubr.bf16.mxu0 0
      %492 = vmatmul.mubr.bf16.gmra.mrb[0].mxu0 %v377
      %v493 = vpop.f32.mrb[0].mxu0
      %v494 = vadd.f32 %v340, %v493
      %v495 = vpop.f32.mrb[0].mxu0
      %v496 = vpop.f32.mrb[0].mxu0
      %v497 = vadd.f32 %v340, %v496
      %v498 = vpop.f32.mrb[0].mxu0
      %499 = vmatprep.mubr.bf16.mxu0 0
      %500 = vmatmul.mubr.bf16.gmra.mrb[0].mxu0 %v380
      %v501 = vpop.f32.mrb[0].mxu0
      %v502 = vadd.f32 %v340, %v501
      %v503 = vpop.f32.mrb[0].mxu0
      %v504 = vpop.f32.mrb[0].mxu0
      %v505 = vadd.f32 %v340, %v504
      %v506 = vpop.f32.mrb[0].mxu0
      %507 = vmatprep.mubr.bf16.mxu0 0
      %508 = vmatmul.mubr.bf16.gmra.mrb[0].mxu0 %v383
      %v509 = vpop.f32.mrb[0].mxu0
      %v510 = vadd.f32 %v340, %v509
      %v511 = vpop.f32.mrb[0].mxu0
      %v512 = vpop.f32.mrb[0].mxu0
      %v513 = vadd.f32 %v340, %v512
      %v514 = vpop.f32.mrb[0].mxu0
      %515 = vmatprep.mubr.bf16.mxu0 0
      %516 = vmatmul.mubr.bf16.gmra.mrb[0].mxu0 %v386
      %v517 = vpop.f32.mrb[0].mxu0
      %v518 = vadd.f32 %v340, %v517
      %v519 = vpop.f32.mrb[0].mxu0
      %v520 = vpop.f32.mrb[0].mxu0
      %v521 = vadd.f32 %v340, %v520
      %v522 = vpop.f32.mrb[0].mxu0
      %523 = vmatprep.mubr.bf16.mxu0 0
      %524 = vmatmul.mubr.bf16.gmra.mrb[0].mxu0 %v389
      %v525 = vpop.f32.mrb[0].mxu0
      %v526 = vadd.f32 %v340, %v525
      %v527 = vpop.f32.mrb[0].mxu0
      %v528 = vpop.f32.mrb[0].mxu0
      %v529 = vadd.f32 %v340, %v528
      %v530 = vpop.f32.mrb[0].mxu0
      %531 = vmatprep.mubr.bf16.mxu0 0
      %532 = vmatmul.mubr.bf16.gmra.mrb[0].mxu0 %v392
      %v533 = vpop.f32.mrb[0].mxu0
      %v534 = vadd.f32 %v340, %v533
      %v535 = vpop.f32.mrb[0].mxu0
      %v536 = vpop.f32.mrb[0].mxu0
      %v537 = vadd.f32 %v340, %v536
      %v538 = vpop.f32.mrb[0].mxu0
      %539 = vmatprep.mubr.bf16.mxu0 0
      %540 = vmatmul.mubr.bf16.gmra.mrb[0].mxu0 %v395
      %v541 = vpop.f32.mrb[0].mxu0
      %v542 = vadd.f32 %v340, %v541
      %v543 = vpop.f32.mrb[0].mxu0
      %v544 = vpop.f32.mrb[0].mxu0
      %v545 = vadd.f32 %v340, %v544
      %v546 = vpop.f32.mrb[0].mxu0
      %547 = vmatprep.mubr.bf16.mxu0 0
      %548 = vmatmul.mubr.bf16.gmra.mrb[0].mxu0 %v398
      %v549 = vpop.f32.mrb[0].mxu0
      %v550 = vadd.f32 %v340, %v549
      %v551 = vpop.f32.mrb[0].mxu0
      %v552 = vpop.f32.mrb[0].mxu0
      %v553 = vadd.f32 %v340, %v552
      %v554 = vpop.f32.mrb[0].mxu0
      %555 = vmatprep.mubr.bf16.mxu0 0
      %556 = vmatmul.mubr.bf16.gmra.mrb[0].mxu0 %v401
      %v557 = vpop.f32.mrb[0].mxu0
      %v558 = vadd.f32 %v340, %v557
      %v559 = vpop.f32.mrb[0].mxu0
      %v560 = vpop.f32.mrb[0].mxu0
      %v561 = vadd.f32 %v340, %v560
      %v562 = vpop.f32.mrb[0].mxu0
      %563 = vdwg.mxu0
      %v564 = vtanh.pop %v438
      %v565 = vtanh.pop %v441
      %v566 = vtanh.pop %v446
      %v567 = vtanh.pop %v449
      %v568 = vtanh.pop %v454
      %v569 = vtanh.pop %v457
      %v570 = vtanh.pop %v462
      %v571 = vtanh.pop %v465
      %v572 = vtanh.pop %v470
      %v573 = vtanh.pop %v473
      %v574 = vtanh.pop %v478
      %v575 = vtanh.pop %v481
      %v576 = vtanh.pop %v486
      %v577 = vtanh.pop %v489
      %v578 = vtanh.pop %v494
      %v579 = vtanh.pop %v497
      %v580 = vtanh.pop %v502
      %v581 = vtanh.pop %v505
      %v582 = vtanh.pop %v510
      %v583 = vtanh.pop %v513
      %v584 = vtanh.pop %v518
      %v585 = vtanh.pop %v521
      %v586 = vtanh.pop %v526
      %v587 = vtanh.pop %v529
      %v588 = vtanh.pop %v534
      %v589 = vtanh.pop %v537
      %v590 = vtanh.pop %v542
      %v591 = vtanh.pop %v545
      %v592 = vtanh.pop %v550
      %v593 = vtanh.pop %v553
      %v594 = vtanh.pop %v558
      %v595 = vtanh.pop %v561
      %v596 = vpack.c.bf16 %v565, %v564
      %v597 = vpack.c.bf16 %v567, %v566
      %v598 = vpack.c.bf16 %v569, %v568
      %v599 = vpack.c.bf16 %v571, %v570
      %v600 = vpack.c.bf16 %v573, %v572
      %v601 = vpack.c.bf16 %v575, %v574
      %v602 = vpack.c.bf16 %v577, %v576
      %v603 = vpack.c.bf16 %v579, %v578
      %v604 = vpack.c.bf16 %v581, %v580
      %v605 = vpack.c.bf16 %v583, %v582
      %v606 = vpack.c.bf16 %v585, %v584
      %v607 = vpack.c.bf16 %v587, %v586
      %v608 = vpack.c.bf16 %v589, %v588
      %v609 = vpack.c.bf16 %v591, %v590
      %v610 = vpack.c.bf16 %v593, %v592
      %v611 = vpack.c.bf16 %v595, %v594
      %v612 = vld [vmem:[%s3] sm:$0xf]
      %v613 = vld [vmem:[%s3 + $0x4] sm:$0xf]
      %v614 = vld [vmem:[%s3 + $0x8] sm:$0xf]
      %v615 = vld [vmem:[%s3 + $0xc] sm:$0xf]
      %v616 = vld [vmem:[%s3 + $0x10] sm:$0xf]
      %v617 = vld [vmem:[%s3 + $0x14] sm:$0xf]
      %v618 = vld [vmem:[%s3 + $0x18] sm:$0xf]
      %v619 = vld [vmem:[%s3 + $0x1c] sm:$0xf]
      %v620 = vld [vmem:[%s3 + $0x20] sm:$0xf]
      %v621 = vld [vmem:[%s3 + $0x24] sm:$0xf]
      %v622 = vld [vmem:[%s3 + $0x28] sm:$0xf]
      %v623 = vld [vmem:[%s3 + $0x2c] sm:$0xf]
      %v624 = vld [vmem:[%s3 + $0x30] sm:$0xf]
      %v625 = vld [vmem:[%s3 + $0x34] sm:$0xf]
      %v626 = vld [vmem:[%s3 + $0x38] sm:$0xf]
      %v627 = vld [vmem:[%s3 + $0x3c] sm:$0xf]
      %v628 = vld [vmem:[%s4] sm:$0x1]
      %v630 = vlaneseq
      %v631 = vshrl.u32 %v630, 7
      %v632 = vsub.s32 0, %v631
      %v633 = vrot.slane %v628, %v632
      %v651 = vunpack.c.l.b16 %v612
      %v652 = vunpack.c.l.b16 %v613
      %v653 = vunpack.c.l.b16 %v614
      %v654 = vunpack.c.l.b16 %v615
      %v655 = vunpack.c.l.b16 %v616
      %v656 = vunpack.c.l.b16 %v617
      %v657 = vunpack.c.l.b16 %v618
      %v658 = vunpack.c.l.b16 %v619
      %v659 = vunpack.c.l.b16 %v620
      %v660 = vunpack.c.l.b16 %v621
      %v661 = vunpack.c.l.b16 %v622
      %v662 = vunpack.c.l.b16 %v623
      %v663 = vunpack.c.l.b16 %v624
      %v664 = vunpack.c.l.b16 %v625
      %v665 = vunpack.c.l.b16 %v626
      %v666 = vunpack.c.l.b16 %v627
      %v667 = vpack.c.b16 %v652, %v651
      %v668 = vpack.c.b16 %v654, %v653
      %v669 = vpack.c.b16 %v656, %v655
      %v670 = vpack.c.b16 %v658, %v657
      %v671 = vpack.c.b16 %v660, %v659
      %v672 = vpack.c.b16 %v662, %v661
      %v673 = vpack.c.b16 %v664, %v663
      %v674 = vpack.c.b16 %v666, %v665
      %683 = vmatprep.subr.bf16.mxu0 0
      %684 = vmatpush1.bf16.msra.mxu0 %v667
      %685 = vmatprep.subr.bf16.mxu0 0
      %686 = vmatpush1.bf16.msra.mxu0 %v668
      %687 = vmatprep.subr.bf16.mxu0 0
      %688 = vmatpush1.bf16.msra.mxu0 %v669
      %689 = vmatprep.subr.bf16.mxu0 0
      %690 = vmatpush1.bf16.msra.mxu0 %v670
      %691 = vmatprep.subr.bf16.mxu0 0
      %692 = vmatpush1.bf16.msra.mxu0 %v671
      %693 = vmatprep.subr.bf16.mxu0 0
      %694 = vmatpush1.bf16.msra.mxu0 %v672
      %695 = vmatprep.subr.bf16.mxu0 0
      %696 = vmatpush1.bf16.msra.mxu0 %v673
      %697 = vmatprep.subr.bf16.mxu0 0
      %698 = vmatpush1.bf16.msra.mxu0 %v674
      %699 = vmatprep.subr.bf16.mxu0 0
      %700 = vmatpush1.bf16.msra.mxu0 0
      %701 = vmatprep.subr.bf16.mxu0 0
      %702 = vmatpush1.bf16.msra.mxu0 0
      %703 = vmatprep.subr.bf16.mxu0 0
      %704 = vmatpush1.bf16.msra.mxu0 0
      %705 = vmatprep.subr.bf16.mxu0 0
      %706 = vmatpush1.bf16.msra.mxu0 0
      %707 = vmatprep.subr.bf16.mxu0 0
      %708 = vmatpush1.bf16.msra.mxu0 0
      %709 = vmatprep.subr.bf16.mxu0 0
      %710 = vmatpush1.bf16.msra.mxu0 0
      %711 = vmatprep.subr.bf16.mxu0 0
      %712 = vmatpush1.bf16.msra.mxu0 0
      %713 = vmatprep.subr.bf16.mxu0 0
      %714 = vmatpush1.bf16.msra.mxu0 0
      %715 = vmatprep.mubr.bf16.mxu0 0
      %716 = vmatmul.mubr.bf16.gmra.mrb[0].mxu0 %v596
      %v717 = vpop.f32.mrb[0].mxu0
      %v718 = vadd.f32 %v633, %v717
      %v719 = vpop.f32.mrb[0].mxu0
      %v720 = vpop.f32.mrb[0].mxu0
      %v721 = vadd.f32 %v633, %v720
      %v722 = vpop.f32.mrb[0].mxu0
      %723 = vmatprep.mubr.bf16.mxu0 0
      %724 = vmatmul.mubr.bf16.gmra.mrb[0].mxu0 %v597
      %v725 = vpop.f32.mrb[0].mxu0
      %v726 = vadd.f32 %v633, %v725
      %v727 = vpop.f32.mrb[0].mxu0
      %v728 = vpop.f32.mrb[0].mxu0
      %v729 = vadd.f32 %v633, %v728
      %v730 = vpop.f32.mrb[0].mxu0
      %731 = vmatprep.mubr.bf16.mxu0 0
      %732 = vmatmul.mubr.bf16.gmra.mrb[0].mxu0 %v598
      %v733 = vpop.f32.mrb[0].mxu0
      %v734 = vadd.f32 %v633, %v733
      %v735 = vpop.f32.mrb[0].mxu0
      %v736 = vpop.f32.mrb[0].mxu0
      %v737 = vadd.f32 %v633, %v736
      %v738 = vpop.f32.mrb[0].mxu0
      %739 = vmatprep.mubr.bf16.mxu0 0
      %740 = vmatmul.mubr.bf16.gmra.mrb[0].mxu0 %v599
      %v741 = vpop.f32.mrb[0].mxu0
      %v742 = vadd.f32 %v633, %v741
      %v743 = vpop.f32.mrb[0].mxu0
      %v744 = vpop.f32.mrb[0].mxu0
      %v745 = vadd.f32 %v633, %v744
      %v746 = vpop.f32.mrb[0].mxu0
      %747 = vmatprep.mubr.bf16.mxu0 0
      %748 = vmatmul.mubr.bf16.gmra.mrb[0].mxu0 %v600
      %v749 = vpop.f32.mrb[0].mxu0
      %v750 = vadd.f32 %v633, %v749
      %v751 = vpop.f32.mrb[0].mxu0
      %v752 = vpop.f32.mrb[0].mxu0
      %v753 = vadd.f32 %v633, %v752
      %v754 = vpop.f32.mrb[0].mxu0
      %755 = vmatprep.mubr.bf16.mxu0 0
      %756 = vmatmul.mubr.bf16.gmra.mrb[0].mxu0 %v601
      %v757 = vpop.f32.mrb[0].mxu0
      %v758 = vadd.f32 %v633, %v757
      %v759 = vpop.f32.mrb[0].mxu0
      %v760 = vpop.f32.mrb[0].mxu0
      %v761 = vadd.f32 %v633, %v760
      %v762 = vpop.f32.mrb[0].mxu0
      %763 = vmatprep.mubr.bf16.mxu0 0
      %764 = vmatmul.mubr.bf16.gmra.mrb[0].mxu0 %v602
      %v765 = vpop.f32.mrb[0].mxu0
      %v766 = vadd.f32 %v633, %v765
      %v767 = vpop.f32.mrb[0].mxu0
      %v768 = vpop.f32.mrb[0].mxu0
      %v769 = vadd.f32 %v633, %v768
      %v770 = vpop.f32.mrb[0].mxu0
      %771 = vmatprep.mubr.bf16.mxu0 0
      %772 = vmatmul.mubr.bf16.gmra.mrb[0].mxu0 %v603
      %v773 = vpop.f32.mrb[0].mxu0
      %v774 = vadd.f32 %v633, %v773
      %v775 = vpop.f32.mrb[0].mxu0
      %v776 = vpop.f32.mrb[0].mxu0
      %v777 = vadd.f32 %v633, %v776
      %v778 = vpop.f32.mrb[0].mxu0
      %779 = vmatprep.mubr.bf16.mxu0 0
      %780 = vmatmul.mubr.bf16.gmra.mrb[0].mxu0 %v604
      %v781 = vpop.f32.mrb[0].mxu0
      %v782 = vadd.f32 %v633, %v781
      %v783 = vpop.f32.mrb[0].mxu0
      %v784 = vpop.f32.mrb[0].mxu0
      %v785 = vadd.f32 %v633, %v784
      %v786 = vpop.f32.mrb[0].mxu0
      %787 = vmatprep.mubr.bf16.mxu0 0
      %788 = vmatmul.mubr.bf16.gmra.mrb[0].mxu0 %v605
      %v789 = vpop.f32.mrb[0].mxu0
      %v790 = vadd.f32 %v633, %v789
      %v791 = vpop.f32.mrb[0].mxu0
      %v792 = vpop.f32.mrb[0].mxu0
      %v793 = vadd.f32 %v633, %v792
      %v794 = vpop.f32.mrb[0].mxu0
      %795 = vmatprep.mubr.bf16.mxu0 0
      %796 = vmatmul.mubr.bf16.gmra.mrb[0].mxu0 %v606
      %v797 = vpop.f32.mrb[0].mxu0
      %v798 = vadd.f32 %v633, %v797
      %v799 = vpop.f32.mrb[0].mxu0
      %v800 = vpop.f32.mrb[0].mxu0
      %v801 = vadd.f32 %v633, %v800
      %v802 = vpop.f32.mrb[0].mxu0
      %803 = vmatprep.mubr.bf16.mxu0 0
      %804 = vmatmul.mubr.bf16.gmra.mrb[0].mxu0 %v607
      %v805 = vpop.f32.mrb[0].mxu0
      %v806 = vadd.f32 %v633, %v805
      %v807 = vpop.f32.mrb[0].mxu0
      %v808 = vpop.f32.mrb[0].mxu0
      %v809 = vadd.f32 %v633, %v808
      %v810 = vpop.f32.mrb[0].mxu0
      %811 = vmatprep.mubr.bf16.mxu0 0
      %812 = vmatmul.mubr.bf16.gmra.mrb[0].mxu0 %v608
      %v813 = vpop.f32.mrb[0].mxu0
      %v814 = vadd.f32 %v633, %v813
      %v815 = vpop.f32.mrb[0].mxu0
      %v816 = vpop.f32.mrb[0].mxu0
      %v817 = vadd.f32 %v633, %v816
      %v818 = vpop.f32.mrb[0].mxu0
      %819 = vmatprep.mubr.bf16.mxu0 0
      %820 = vmatmul.mubr.bf16.gmra.mrb[0].mxu0 %v609
      %v821 = vpop.f32.mrb[0].mxu0
      %v822 = vadd.f32 %v633, %v821
      %v823 = vpop.f32.mrb[0].mxu0
      %v824 = vpop.f32.mrb[0].mxu0
      %v825 = vadd.f32 %v633, %v824
      %v826 = vpop.f32.mrb[0].mxu0
      %827 = vmatprep.mubr.bf16.mxu0 0
      %828 = vmatmul.mubr.bf16.gmra.mrb[0].mxu0 %v610
      %v829 = vpop.f32.mrb[0].mxu0
      %v830 = vadd.f32 %v633, %v829
      %v831 = vpop.f32.mrb[0].mxu0
      %v832 = vpop.f32.mrb[0].mxu0
      %v833 = vadd.f32 %v633, %v832
      %v834 = vpop.f32.mrb[0].mxu0
      %835 = vmatprep.mubr.bf16.mxu0 0
      %836 = vmatmul.mubr.bf16.gmra.mrb[0].mxu0 %v611
      %v837 = vpop.f32.mrb[0].mxu0
      %v838 = vadd.f32 %v633, %v837
      %v839 = vpop.f32.mrb[0].mxu0
      %v840 = vpop.f32.mrb[0].mxu0
      %v841 = vadd.f32 %v633, %v840
      %v842 = vpop.f32.mrb[0].mxu0
      %843 = vdwg.mxu0
      %844 = vmax.xlane.f32.xlu0 %v718
      %v845 = vpop.xlane.xlu0 %844
      %846 = vmax.xlane.f32.xlu0 %v721
      %v847 = vpop.xlane.xlu0 %846
      %848 = vmax.xlane.f32.xlu0 %v726
      %v849 = vpop.xlane.xlu0 %848
      %850 = vmax.xlane.f32.xlu0 %v729
      %v851 = vpop.xlane.xlu0 %850
      %852 = vmax.xlane.f32.xlu0 %v734
      %v853 = vpop.xlane.xlu0 %852
      %854 = vmax.xlane.f32.xlu0 %v737
      %v855 = vpop.xlane.xlu0 %854
      %856 = vmax.xlane.f32.xlu0 %v742
      %v857 = vpop.xlane.xlu0 %856
      %858 = vmax.xlane.f32.xlu0 %v745
      %v859 = vpop.xlane.xlu0 %858
      %860 = vmax.xlane.f32.xlu0 %v750
      %v861 = vpop.xlane.xlu0 %860
      %862 = vmax.xlane.f32.xlu0 %v753
      %v863 = vpop.xlane.xlu0 %862
      %864 = vmax.xlane.f32.xlu0 %v758
      %v865 = vpop.xlane.xlu0 %864
      %866 = vmax.xlane.f32.xlu0 %v761
      %v867 = vpop.xlane.xlu0 %866
      %868 = vmax.xlane.f32.xlu0 %v766
      %v869 = vpop.xlane.xlu0 %868
      %870 = vmax.xlane.f32.xlu0 %v769
      %v871 = vpop.xlane.xlu0 %870
      %872 = vmax.xlane.f32.xlu0 %v774
      %v873 = vpop.xlane.xlu0 %872
      %874 = vmax.xlane.f32.xlu0 %v777
      %v875 = vpop.xlane.xlu0 %874
      %876 = vmax.xlane.f32.xlu0 %v782
      %v877 = vpop.xlane.xlu0 %876
      %878 = vmax.xlane.f32.xlu0 %v785
      %v879 = vpop.xlane.xlu0 %878
      %880 = vmax.xlane.f32.xlu0 %v790
      %v881 = vpop.xlane.xlu0 %880
      %882 = vmax.xlane.f32.xlu0 %v793
      %v883 = vpop.xlane.xlu0 %882
      %884 = vmax.xlane.f32.xlu0 %v798
      %v885 = vpop.xlane.xlu0 %884
      %886 = vmax.xlane.f32.xlu0 %v801
      %v887 = vpop.xlane.xlu0 %886
      %888 = vmax.xlane.f32.xlu0 %v806
      %v889 = vpop.xlane.xlu0 %888
      %890 = vmax.xlane.f32.xlu0 %v809
      %v891 = vpop.xlane.xlu0 %890
      %892 = vmax.xlane.f32.xlu0 %v814
      %v893 = vpop.xlane.xlu0 %892
      %894 = vmax.xlane.f32.xlu0 %v817
      %v895 = vpop.xlane.xlu0 %894
      %896 = vmax.xlane.f32.xlu0 %v822
      %v897 = vpop.xlane.xlu0 %896
      %898 = vmax.xlane.f32.xlu0 %v825
      %v899 = vpop.xlane.xlu0 %898
      %900 = vmax.xlane.f32.xlu0 %v830
      %v901 = vpop.xlane.xlu0 %900
      %902 = vmax.xlane.f32.xlu0 %v833
      %v903 = vpop.xlane.xlu0 %902
      %904 = vmax.xlane.f32.xlu0 %v838
      %v905 = vpop.xlane.xlu0 %904
      %906 = vmax.xlane.f32.xlu0 %v841
      %v907 = vpop.xlane.xlu0 %906
      %v908 = vsub.f32 %v718, %v845
      %v909 = vsub.f32 %v721, %v847
      %v910 = vsub.f32 %v726, %v849
      %v911 = vsub.f32 %v729, %v851
      %v912 = vsub.f32 %v734, %v853
      %v913 = vsub.f32 %v737, %v855
      %v914 = vsub.f32 %v742, %v857
      %v915 = vsub.f32 %v745, %v859
      %v916 = vsub.f32 %v750, %v861
      %v917 = vsub.f32 %v753, %v863
      %v918 = vsub.f32 %v758, %v865
      %v919 = vsub.f32 %v761, %v867
      %v920 = vsub.f32 %v766, %v869
      %v921 = vsub.f32 %v769, %v871
      %v922 = vsub.f32 %v774, %v873
      %v923 = vsub.f32 %v777, %v875
      %v924 = vsub.f32 %v782, %v877
      %v925 = vsub.f32 %v785, %v879
      %v926 = vsub.f32 %v790, %v881
      %v927 = vsub.f32 %v793, %v883
      %v928 = vsub.f32 %v798, %v885
      %v929 = vsub.f32 %v801, %v887
      %v930 = vsub.f32 %v806, %v889
      %v931 = vsub.f32 %v809, %v891
      %v932 = vsub.f32 %v814, %v893
      %v933 = vsub.f32 %v817, %v895
      %v934 = vsub.f32 %v822, %v897
      %v935 = vsub.f32 %v825, %v899
      %v936 = vsub.f32 %v830, %v901
      %v937 = vsub.f32 %v833, %v903
      %v938 = vsub.f32 %v838, %v905
      %v939 = vsub.f32 %v841, %v907
      %v940 = vmul.f32 %v908, 1.442695
      %v941 = vpow.pop %v940
      %v942 = vmul.f32 %v909, 1.442695
      %v943 = vpow.pop %v942
      %v944 = vmul.f32 %v910, 1.442695
      %v945 = vpow.pop %v944
      %v946 = vmul.f32 %v911, 1.442695
      %v947 = vpow.pop %v946
      %v948 = vmul.f32 %v912, 1.442695
      %v949 = vpow.pop %v948
      %v950 = vmul.f32 %v913, 1.442695
      %v951 = vpow.pop %v950
      %v952 = vmul.f32 %v914, 1.442695
      %v953 = vpow.pop %v952
      %v954 = vmul.f32 %v915, 1.442695
      %v955 = vpow.pop %v954
      %v956 = vmul.f32 %v916, 1.442695
      %v957 = vpow.pop %v956
      %v958 = vmul.f32 %v917, 1.442695
      %v959 = vpow.pop %v958
      %v960 = vmul.f32 %v918, 1.442695
      %v961 = vpow.pop %v960
      %v962 = vmul.f32 %v919, 1.442695
      %v963 = vpow.pop %v962
      %v964 = vmul.f32 %v920, 1.442695
      %v965 = vpow.pop %v964
      %v966 = vmul.f32 %v921, 1.442695
      %v967 = vpow.pop %v966
      %v968 = vmul.f32 %v922, 1.442695
      %v969 = vpow.pop %v968
      %v970 = vmul.f32 %v923, 1.442695
      %v971 = vpow.pop %v970
      %v972 = vmul.f32 %v924, 1.442695
      %v973 = vpow.pop %v972
      %v974 = vmul.f32 %v925, 1.442695
      %v975 = vpow.pop %v974
      %v976 = vmul.f32 %v926, 1.442695
      %v977 = vpow.pop %v976
      %v978 = vmul.f32 %v927, 1.442695
      %v979 = vpow.pop %v978
      %v980 = vmul.f32 %v928, 1.442695
      %v981 = vpow.pop %v980
      %v982 = vmul.f32 %v929, 1.442695
      %v983 = vpow.pop %v982
      %v984 = vmul.f32 %v930, 1.442695
      %v985 = vpow.pop %v984
      %v986 = vmul.f32 %v931, 1.442695
      %v987 = vpow.pop %v986
      %v988 = vmul.f32 %v932, 1.442695
      %v989 = vpow.pop %v988
      %v990 = vmul.f32 %v933, 1.442695
      %v991 = vpow.pop %v990
      %v992 = vmul.f32 %v934, 1.442695
      %v993 = vpow.pop %v992
      %v994 = vmul.f32 %v935, 1.442695
      %v995 = vpow.pop %v994
      %v996 = vmul.f32 %v936, 1.442695
      %v997 = vpow.pop %v996
      %v998 = vmul.f32 %v937, 1.442695
      %v999 = vpow.pop %v998
      %v1000 = vmul.f32 %v938, 1.442695
      %v1001 = vpow.pop %v1000
      %v1002 = vmul.f32 %v939, 1.442695
      %v1003 = vpow.pop %v1002
      %1004 = vadd.xlane.f32.xlu0 %v941
      %v1005 = vpop.xlane.xlu0 %1004
      %1006 = vadd.xlane.f32.xlu0 %v943
      %v1007 = vpop.xlane.xlu0 %1006
      %1008 = vadd.xlane.f32.xlu0 %v945
      %v1009 = vpop.xlane.xlu0 %1008
      %1010 = vadd.xlane.f32.xlu0 %v947
      %v1011 = vpop.xlane.xlu0 %1010
      %1012 = vadd.xlane.f32.xlu0 %v949
      %v1013 = vpop.xlane.xlu0 %1012
      %1014 = vadd.xlane.f32.xlu0 %v951
      %v1015 = vpop.xlane.xlu0 %1014
      %1016 = vadd.xlane.f32.xlu0 %v953
      %v1017 = vpop.xlane.xlu0 %1016
      %1018 = vadd.xlane.f32.xlu0 %v955
      %v1019 = vpop.xlane.xlu0 %1018
      %1020 = vadd.xlane.f32.xlu0 %v957
      %v1021 = vpop.xlane.xlu0 %1020
      %1022 = vadd.xlane.f32.xlu0 %v959
      %v1023 = vpop.xlane.xlu0 %1022
      %1024 = vadd.xlane.f32.xlu0 %v961
      %v1025 = vpop.xlane.xlu0 %1024
      %1026 = vadd.xlane.f32.xlu0 %v963
      %v1027 = vpop.xlane.xlu0 %1026
      %1028 = vadd.xlane.f32.xlu0 %v965
      %v1029 = vpop.xlane.xlu0 %1028
      %1030 = vadd.xlane.f32.xlu0 %v967
      %v1031 = vpop.xlane.xlu0 %1030
      %1032 = vadd.xlane.f32.xlu0 %v969
      %v1033 = vpop.xlane.xlu0 %1032
      %1034 = vadd.xlane.f32.xlu0 %v971
      %v1035 = vpop.xlane.xlu0 %1034
      %1036 = vadd.xlane.f32.xlu0 %v973
      %v1037 = vpop.xlane.xlu0 %1036
      %1038 = vadd.xlane.f32.xlu0 %v975
      %v1039 = vpop.xlane.xlu0 %1038
      %1040 = vadd.xlane.f32.xlu0 %v977
      %v1041 = vpop.xlane.xlu0 %1040
      %1042 = vadd.xlane.f32.xlu0 %v979
      %v1043 = vpop.xlane.xlu0 %1042
      %1044 = vadd.xlane.f32.xlu0 %v981
      %v1045 = vpop.xlane.xlu0 %1044
      %1046 = vadd.xlane.f32.xlu0 %v983
      %v1047 = vpop.xlane.xlu0 %1046
      %1048 = vadd.xlane.f32.xlu0 %v985
      %v1049 = vpop.xlane.xlu0 %1048
      %1050 = vadd.xlane.f32.xlu0 %v987
      %v1051 = vpop.xlane.xlu0 %1050
      %1052 = vadd.xlane.f32.xlu0 %v989
      %v1053 = vpop.xlane.xlu0 %1052
      %1054 = vadd.xlane.f32.xlu0 %v991
      %v1055 = vpop.xlane.xlu0 %1054
      %1056 = vadd.xlane.f32.xlu0 %v993
      %v1057 = vpop.xlane.xlu0 %1056
      %1058 = vadd.xlane.f32.xlu0 %v995
      %v1059 = vpop.xlane.xlu0 %1058
      %1060 = vadd.xlane.f32.xlu0 %v997
      %v1061 = vpop.xlane.xlu0 %1060
      %1062 = vadd.xlane.f32.xlu0 %v999
      %v1063 = vpop.xlane.xlu0 %1062
      %1064 = vadd.xlane.f32.xlu0 %v1001
      %v1065 = vpop.xlane.xlu0 %1064
      %1066 = vadd.xlane.f32.xlu0 %v1003
      %v1067 = vpop.xlane.xlu0 %1066
      %v1068 = vrcp.pop %v1005
      %v1069 = vmul.f32 %v941, %v1068
      %v1070 = vrcp.pop %v1007
      %v1071 = vmul.f32 %v943, %v1070
      %v1072 = vrcp.pop %v1009
      %v1073 = vmul.f32 %v945, %v1072
      %v1074 = vrcp.pop %v1011
      %v1075 = vmul.f32 %v947, %v1074
      %v1076 = vrcp.pop %v1013
      %v1077 = vmul.f32 %v949, %v1076
      %v1078 = vrcp.pop %v1015
      %v1079 = vmul.f32 %v951, %v1078
      %v1080 = vrcp.pop %v1017
      %v1081 = vmul.f32 %v953, %v1080
      %v1082 = vrcp.pop %v1019
      %v1083 = vmul.f32 %v955, %v1082
      %v1084 = vrcp.pop %v1021
      %v1085 = vmul.f32 %v957, %v1084
      %v1086 = vrcp.pop %v1023
      %v1087 = vmul.f32 %v959, %v1086
      %v1088 = vrcp.pop %v1025
      %v1089 = vmul.f32 %v961, %v1088
      %v1090 = vrcp.pop %v1027
      %v1091 = vmul.f32 %v963, %v1090
      %v1092 = vrcp.pop %v1029
      %v1093 = vmul.f32 %v965, %v1092
      %v1094 = vrcp.pop %v1031
      %v1095 = vmul.f32 %v967, %v1094
      %v1096 = vrcp.pop %v1033
      %v1097 = vmul.f32 %v969, %v1096
      %v1098 = vrcp.pop %v1035
      %v1099 = vmul.f32 %v971, %v1098
      %v1100 = vrcp.pop %v1037
      %v1101 = vmul.f32 %v973, %v1100
      %v1102 = vrcp.pop %v1039
      %v1103 = vmul.f32 %v975, %v1102
      %v1104 = vrcp.pop %v1041
      %v1105 = vmul.f32 %v977, %v1104
      %v1106 = vrcp.pop %v1043
      %v1107 = vmul.f32 %v979, %v1106
      %v1108 = vrcp.pop %v1045
      %v1109 = vmul.f32 %v981, %v1108
      %v1110 = vrcp.pop %v1047
      %v1111 = vmul.f32 %v983, %v1110
      %v1112 = vrcp.pop %v1049
      %v1113 = vmul.f32 %v985, %v1112
      %v1114 = vrcp.pop %v1051
      %v1115 = vmul.f32 %v987, %v1114
      %v1116 = vrcp.pop %v1053
      %v1117 = vmul.f32 %v989, %v1116
      %v1118 = vrcp.pop %v1055
      %v1119 = vmul.f32 %v991, %v1118
      %v1120 = vrcp.pop %v1057
      %v1121 = vmul.f32 %v993, %v1120
      %v1122 = vrcp.pop %v1059
      %v1123 = vmul.f32 %v995, %v1122
      %v1124 = vrcp.pop %v1061
      %v1125 = vmul.f32 %v997, %v1124
      %v1126 = vrcp.pop %v1063
      %v1127 = vmul.f32 %v999, %v1126
      %v1128 = vrcp.pop %v1065
      %v1129 = vmul.f32 %v1001, %v1128
      %v1130 = vrcp.pop %v1067
      %v1131 = vmul.f32 %v1003, %v1130
      %v1132 = vpack.c.bf16 %v1071, %v1069
      %v1133 = vpack.c.bf16 %v1075, %v1073
      %v1134 = vpack.c.bf16 %v1079, %v1077
      %v1135 = vpack.c.bf16 %v1083, %v1081
      %v1136 = vpack.c.bf16 %v1087, %v1085
      %v1137 = vpack.c.bf16 %v1091, %v1089
      %v1138 = vpack.c.bf16 %v1095, %v1093
      %v1139 = vpack.c.bf16 %v1099, %v1097
      %v1140 = vpack.c.bf16 %v1103, %v1101
      %v1141 = vpack.c.bf16 %v1107, %v1105
      %v1142 = vpack.c.bf16 %v1111, %v1109
      %v1143 = vpack.c.bf16 %v1115, %v1113
      %v1144 = vpack.c.bf16 %v1119, %v1117
      %v1145 = vpack.c.bf16 %v1123, %v1121
      %v1146 = vpack.c.bf16 %v1127, %v1125
      %v1147 = vpack.c.bf16 %v1131, %v1129
      %v1148 = vld [vmem:[%s5] sm:$0xf]
      %v1149 = vld [vmem:[%s5 + $0x4] sm:$0xf]
      %v1150 = vld [vmem:[%s5 + $0x8] sm:$0xf]
      %v1151 = vld [vmem:[%s5 + $0xc] sm:$0xf]
      %v1152 = vld [vmem:[%s5 + $0x10] sm:$0xf]
      %v1153 = vld [vmem:[%s5 + $0x14] sm:$0xf]
      %v1154 = vld [vmem:[%s5 + $0x18] sm:$0xf]
      %v1155 = vld [vmem:[%s5 + $0x1c] sm:$0xf]
      %v1156 = vld [vmem:[%s5 + $0x20] sm:$0xf]
      %v1157 = vld [vmem:[%s5 + $0x24] sm:$0xf]
      %v1158 = vld [vmem:[%s5 + $0x28] sm:$0xf]
      %v1159 = vld [vmem:[%s5 + $0x2c] sm:$0xf]
      %v1160 = vld [vmem:[%s5 + $0x30] sm:$0xf]
      %v1161 = vld [vmem:[%s5 + $0x34] sm:$0xf]
      %v1162 = vld [vmem:[%s5 + $0x38] sm:$0xf]
      %v1163 = vld [vmem:[%s5 + $0x3c] sm:$0xf]
      %v1164 = vld [vmem:[%s6] sm:$0x1]
      %v1166 = vlaneseq
      %v1167 = vshrl.u32 %v1166, 7
      %v1168 = vsub.s32 0, %v1167
      %v1169 = vrot.slane %v1164, %v1168
      %v1187 = vunpack.c.l.b16 %v1148
      %v1188 = vunpack.c.l.b16 %v1149
      %v1189 = vunpack.c.l.b16 %v1150
      %v1190 = vunpack.c.l.b16 %v1151
      %v1191 = vunpack.c.l.b16 %v1152
      %v1192 = vunpack.c.l.b16 %v1153
      %v1193 = vunpack.c.l.b16 %v1154
      %v1194 = vunpack.c.l.b16 %v1155
      %v1195 = vunpack.c.l.b16 %v1156
      %v1196 = vunpack.c.l.b16 %v1157
      %v1197 = vunpack.c.l.b16 %v1158
      %v1198 = vunpack.c.l.b16 %v1159
      %v1199 = vunpack.c.l.b16 %v1160
      %v1200 = vunpack.c.l.b16 %v1161
      %v1201 = vunpack.c.l.b16 %v1162
      %v1202 = vunpack.c.l.b16 %v1163
      %v1203 = vpack.c.b16 %v1188, %v1187
      %v1204 = vpack.c.b16 %v1190, %v1189
      %v1205 = vpack.c.b16 %v1192, %v1191
      %v1206 = vpack.c.b16 %v1194, %v1193
      %v1207 = vpack.c.b16 %v1196, %v1195
      %v1208 = vpack.c.b16 %v1198, %v1197
      %v1209 = vpack.c.b16 %v1200, %v1199
      %v1210 = vpack.c.b16 %v1202, %v1201
      %1219 = vmatprep.subr.bf16.mxu0 0
      %1220 = vmatpush1.bf16.msra.mxu0 %v1203
      %1221 = vmatprep.subr.bf16.mxu0 0
      %1222 = vmatpush1.bf16.msra.mxu0 %v1204
      %1223 = vmatprep.subr.bf16.mxu0 0
      %1224 = vmatpush1.bf16.msra.mxu0 %v1205
      %1225 = vmatprep.subr.bf16.mxu0 0
      %1226 = vmatpush1.bf16.msra.mxu0 %v1206
      %1227 = vmatprep.subr.bf16.mxu0 0
      %1228 = vmatpush1.bf16.msra.mxu0 %v1207
      %1229 = vmatprep.subr.bf16.mxu0 0
      %1230 = vmatpush1.bf16.msra.mxu0 %v1208
      %1231 = vmatprep.subr.bf16.mxu0 0
      %1232 = vmatpush1.bf16.msra.mxu0 %v1209
      %1233 = vmatprep.subr.bf16.mxu0 0
      %1234 = vmatpush1.bf16.msra.mxu0 %v1210
      %1235 = vmatprep.subr.bf16.mxu0 0
      %1236 = vmatpush1.bf16.msra.mxu0 0
      %1237 = vmatprep.subr.bf16.mxu0 0
      %1238 = vmatpush1.bf16.msra.mxu0 0
      %1239 = vmatprep.subr.bf16.mxu0 0
      %1240 = vmatpush1.bf16.msra.mxu0 0
      %1241 = vmatprep.subr.bf16.mxu0 0
      %1242 = vmatpush1.bf16.msra.mxu0 0
      %1243 = vmatprep.subr.bf16.mxu0 0
      %1244 = vmatpush1.bf16.msra.mxu0 0
      %1245 = vmatprep.subr.bf16.mxu0 0
      %1246 = vmatpush1.bf16.msra.mxu0 0
      %1247 = vmatprep.subr.bf16.mxu0 0
      %1248 = vmatpush1.bf16.msra.mxu0 0
      %1249 = vmatprep.subr.bf16.mxu0 0
      %1250 = vmatpush1.bf16.msra.mxu0 0
      %1251 = vmatprep.mubr.bf16.mxu0 0
      %1252 = vmatmul.mubr.bf16.gmra.mrb[0].mxu0 %v1132
      %v1253 = vpop.f32.mrb[0].mxu0
      %v1254 = vadd.f32 %v1169, %v1253
      %v1255 = vpop.f32.mrb[0].mxu0
      %v1256 = vpop.f32.mrb[0].mxu0
      %v1257 = vadd.f32 %v1169, %v1256
      %v1258 = vpop.f32.mrb[0].mxu0
      %1259 = vmatprep.mubr.bf16.mxu0 0
      %1260 = vmatmul.mubr.bf16.gmra.mrb[0].mxu0 %v1133
      %v1261 = vpop.f32.mrb[0].mxu0
      %v1262 = vadd.f32 %v1169, %v1261
      %v1263 = vpop.f32.mrb[0].mxu0
      %v1264 = vpop.f32.mrb[0].mxu0
      %v1265 = vadd.f32 %v1169, %v1264
      %v1266 = vpop.f32.mrb[0].mxu0
      %1267 = vmatprep.mubr.bf16.mxu0 0
      %1268 = vmatmul.mubr.bf16.gmra.mrb[0].mxu0 %v1134
      %v1269 = vpop.f32.mrb[0].mxu0
      %v1270 = vadd.f32 %v1169, %v1269
      %v1271 = vpop.f32.mrb[0].mxu0
      %v1272 = vpop.f32.mrb[0].mxu0
      %v1273 = vadd.f32 %v1169, %v1272
      %v1274 = vpop.f32.mrb[0].mxu0
      %1275 = vmatprep.mubr.bf16.mxu0 0
      %1276 = vmatmul.mubr.bf16.gmra.mrb[0].mxu0 %v1135
      %v1277 = vpop.f32.mrb[0].mxu0
      %v1278 = vadd.f32 %v1169, %v1277
      %v1279 = vpop.f32.mrb[0].mxu0
      %v1280 = vpop.f32.mrb[0].mxu0
      %v1281 = vadd.f32 %v1169, %v1280
      %v1282 = vpop.f32.mrb[0].mxu0
      %1283 = vmatprep.mubr.bf16.mxu0 0
      %1284 = vmatmul.mubr.bf16.gmra.mrb[0].mxu0 %v1136
      %v1285 = vpop.f32.mrb[0].mxu0
      %v1286 = vadd.f32 %v1169, %v1285
      %v1287 = vpop.f32.mrb[0].mxu0
      %v1288 = vpop.f32.mrb[0].mxu0
      %v1289 = vadd.f32 %v1169, %v1288
      %v1290 = vpop.f32.mrb[0].mxu0
      %1291 = vmatprep.mubr.bf16.mxu0 0
      %1292 = vmatmul.mubr.bf16.gmra.mrb[0].mxu0 %v1137
      %v1293 = vpop.f32.mrb[0].mxu0
      %v1294 = vadd.f32 %v1169, %v1293
      %v1295 = vpop.f32.mrb[0].mxu0
      %v1296 = vpop.f32.mrb[0].mxu0
      %v1297 = vadd.f32 %v1169, %v1296
      %v1298 = vpop.f32.mrb[0].mxu0
      %1299 = vmatprep.mubr.bf16.mxu0 0
      %1300 = vmatmul.mubr.bf16.gmra.mrb[0].mxu0 %v1138
      %v1301 = vpop.f32.mrb[0].mxu0
      %v1302 = vadd.f32 %v1169, %v1301
      %v1303 = vpop.f32.mrb[0].mxu0
      %v1304 = vpop.f32.mrb[0].mxu0
      %v1305 = vadd.f32 %v1169, %v1304
      %v1306 = vpop.f32.mrb[0].mxu0
      %1307 = vmatprep.mubr.bf16.mxu0 0
      %1308 = vmatmul.mubr.bf16.gmra.mrb[0].mxu0 %v1139
      %v1309 = vpop.f32.mrb[0].mxu0
      %v1310 = vadd.f32 %v1169, %v1309
      %v1311 = vpop.f32.mrb[0].mxu0
      %v1312 = vpop.f32.mrb[0].mxu0
      %v1313 = vadd.f32 %v1169, %v1312
      %v1314 = vpop.f32.mrb[0].mxu0
      %1315 = vmatprep.mubr.bf16.mxu0 0
      %1316 = vmatmul.mubr.bf16.gmra.mrb[0].mxu0 %v1140
      %v1317 = vpop.f32.mrb[0].mxu0
      %v1318 = vadd.f32 %v1169, %v1317
      %v1319 = vpop.f32.mrb[0].mxu0
      %v1320 = vpop.f32.mrb[0].mxu0
      %v1321 = vadd.f32 %v1169, %v1320
      %v1322 = vpop.f32.mrb[0].mxu0
      %1323 = vmatprep.mubr.bf16.mxu0 0
      %1324 = vmatmul.mubr.bf16.gmra.mrb[0].mxu0 %v1141
      %v1325 = vpop.f32.mrb[0].mxu0
      %v1326 = vadd.f32 %v1169, %v1325
      %v1327 = vpop.f32.mrb[0].mxu0
      %v1328 = vpop.f32.mrb[0].mxu0
      %v1329 = vadd.f32 %v1169, %v1328
      %v1330 = vpop.f32.mrb[0].mxu0
      %1331 = vmatprep.mubr.bf16.mxu0 0
      %1332 = vmatmul.mubr.bf16.gmra.mrb[0].mxu0 %v1142
      %v1333 = vpop.f32.mrb[0].mxu0
      %v1334 = vadd.f32 %v1169, %v1333
      %v1335 = vpop.f32.mrb[0].mxu0
      %v1336 = vpop.f32.mrb[0].mxu0
      %v1337 = vadd.f32 %v1169, %v1336
      %v1338 = vpop.f32.mrb[0].mxu0
      %1339 = vmatprep.mubr.bf16.mxu0 0
      %1340 = vmatmul.mubr.bf16.gmra.mrb[0].mxu0 %v1143
      %v1341 = vpop.f32.mrb[0].mxu0
      %v1342 = vadd.f32 %v1169, %v1341
      %v1343 = vpop.f32.mrb[0].mxu0
      %v1344 = vpop.f32.mrb[0].mxu0
      %v1345 = vadd.f32 %v1169, %v1344
      %v1346 = vpop.f32.mrb[0].mxu0
      %1347 = vmatprep.mubr.bf16.mxu0 0
      %1348 = vmatmul.mubr.bf16.gmra.mrb[0].mxu0 %v1144
      %v1349 = vpop.f32.mrb[0].mxu0
      %v1350 = vadd.f32 %v1169, %v1349
      %v1351 = vpop.f32.mrb[0].mxu0
      %v1352 = vpop.f32.mrb[0].mxu0
      %v1353 = vadd.f32 %v1169, %v1352
      %v1354 = vpop.f32.mrb[0].mxu0
      %1355 = vmatprep.mubr.bf16.mxu0 0
      %1356 = vmatmul.mubr.bf16.gmra.mrb[0].mxu0 %v1145
      %v1357 = vpop.f32.mrb[0].mxu0
      %v1358 = vadd.f32 %v1169, %v1357
      %v1359 = vpop.f32.mrb[0].mxu0
      %v1360 = vpop.f32.mrb[0].mxu0
      %v1361 = vadd.f32 %v1169, %v1360
      %v1362 = vpop.f32.mrb[0].mxu0
      %1363 = vmatprep.mubr.bf16.mxu0 0
      %1364 = vmatmul.mubr.bf16.gmra.mrb[0].mxu0 %v1146
      %v1365 = vpop.f32.mrb[0].mxu0
      %v1366 = vadd.f32 %v1169, %v1365
      %v1367 = vpop.f32.mrb[0].mxu0
      %v1368 = vpop.f32.mrb[0].mxu0
      %v1369 = vadd.f32 %v1169, %v1368
      %v1370 = vpop.f32.mrb[0].mxu0
      %1371 = vmatprep.mubr.bf16.mxu0 0
      %1372 = vmatmul.mubr.bf16.gmra.mrb[0].mxu0 %v1147
      %v1373 = vpop.f32.mrb[0].mxu0
      %v1374 = vadd.f32 %v1169, %v1373
      %v1375 = vpop.f32.mrb[0].mxu0
      %v1376 = vpop.f32.mrb[0].mxu0
      %v1377 = vadd.f32 %v1169, %v1376
      %v1378 = vpop.f32.mrb[0].mxu0
      %1379 = vdwg.mxu0
      %vm1380 = vcmask 130048
      %1381 = vst.msk [vmem:[%s280] sm:$0xff] %vm1380, %v1254
      %1382 = vst.msk [vmem:[%s280 + $0x8] sm:$0xff] %vm1380, %v1257
      %1383 = vst.msk [vmem:[%s280 + $0x10] sm:$0xff] %vm1380, %v1262
      %1384 = vst.msk [vmem:[%s280 + $0x18] sm:$0xff] %vm1380, %v1265
      %1385 = vst.msk [vmem:[%s280 + $0x20] sm:$0xff] %vm1380, %v1270
      %1386 = vst.msk [vmem:[%s280 + $0x28] sm:$0xff] %vm1380, %v1273
      %1387 = vst.msk [vmem:[%s280 + $0x30] sm:$0xff] %vm1380, %v1278
      %1388 = vst.msk [vmem:[%s280 + $0x38] sm:$0xff] %vm1380, %v1281
      %1389 = vst.msk [vmem:[%s280 + $0x40] sm:$0xff] %vm1380, %v1286
      %1390 = vst.msk [vmem:[%s280 + $0x48] sm:$0xff] %vm1380, %v1289
      %1391 = vst.msk [vmem:[%s280 + $0x50] sm:$0xff] %vm1380, %v1294
      %1392 = vst.msk [vmem:[%s280 + $0x58] sm:$0xff] %vm1380, %v1297
      %1393 = vst.msk [vmem:[%s280 + $0x60] sm:$0xff] %vm1380, %v1302
      %1394 = vst.msk [vmem:[%s280 + $0x68] sm:$0xff] %vm1380, %v1305
      %1395 = vst.msk [vmem:[%s280 + $0x70] sm:$0xff] %vm1380, %v1310
      %1396 = vst.msk [vmem:[%s280 + $0x78] sm:$0xff] %vm1380, %v1313
      %1397 = vst.msk [vmem:[%s280 + $0x80] sm:$0xff] %vm1380, %v1318
      %1398 = vst.msk [vmem:[%s280 + $0x88] sm:$0xff] %vm1380, %v1321
      %1399 = vst.msk [vmem:[%s280 + $0x90] sm:$0xff] %vm1380, %v1326
      %1400 = vst.msk [vmem:[%s280 + $0x98] sm:$0xff] %vm1380, %v1329
      %1401 = vst.msk [vmem:[%s280 + $0xa0] sm:$0xff] %vm1380, %v1334
      %1402 = vst.msk [vmem:[%s280 + $0xa8] sm:$0xff] %vm1380, %v1337
      %1403 = vst.msk [vmem:[%s280 + $0xb0] sm:$0xff] %vm1380, %v1342
      %1404 = vst.msk [vmem:[%s280 + $0xb8] sm:$0xff] %vm1380, %v1345
      %1405 = vst.msk [vmem:[%s280 + $0xc0] sm:$0xff] %vm1380, %v1350
      %1406 = vst.msk [vmem:[%s280 + $0xc8] sm:$0xff] %vm1380, %v1353
      %1407 = vst.msk [vmem:[%s280 + $0xd0] sm:$0xff] %vm1380, %v1358
      %1408 = vst.msk [vmem:[%s280 + $0xd8] sm:$0xff] %vm1380, %v1361
      %1409 = vst.msk [vmem:[%s280 + $0xe0] sm:$0xff] %vm1380, %v1366
      %1410 = vst.msk [vmem:[%s280 + $0xe8] sm:$0xff] %vm1380, %v1369
      %1411 = vst.msk [vmem:[%s280 + $0xf0] sm:$0xff] %vm1380, %v1374
      %1412 = vst.msk [vmem:[%s280 + $0xf8] sm:$0xff] %vm1380, %v1377
      %s1413 = smul.u32 32, %s18
      %p1414 = scmp.lt.s32.totalorder %s1413, 63
      %s1415 = scalar_select %p1414, %s1413, 63
      %s1416 = smul.addr %s1415, 8
      %s1417 = scalar_lea.vmem %s7, %s1416
      // Predicated region
      $region49: #{tpu_custom_call.1} parent=47 // pred_check
        %p1418 = pneg %p188
      $region50: #{tpu_custom_call.1} parent=47 // pred_check_branch
        %1420 = sbr.rel (%p1418) target = $region52
      $region51: #{tpu_custom_call.1} parent=47 // pred_region
        %s1421 = smul.u32 32, %s18
      $region52: #{tpu_custom_call.1} parent=47 // pred_fallthru
        _
    $region48: #{tpu_custom_call.1} parent=5 // pred_fallthru
      _
    %p1422 = scmp.le.s32.totalorder 2, %s13
    // Predicated region
    $region53: #{tpu_custom_call.1} parent=5 // pred_check
      %p1423 = pneg %p1422
    $region54: #{tpu_custom_call.1} parent=5 // pred_check_branch
      %1425 = sbr.rel (%p1423) target = $region56
    $region55: #{tpu_custom_call.1} parent=5 // pred_region
      %s1426 = ssub.s32 %s13, 2
      // Predicated region
      $region57: #{tpu_custom_call.1} parent=55 // pred_check
        %p1427 = pneg %p194
      $region58: #{tpu_custom_call.1} parent=55 // pred_check_branch
        %1429 = sbr.rel (%p1427) target = $region60
      $region59: #{tpu_custom_call.1} parent=55 // pred_region
        %s1430 = smul.u32 32, %s19
        %p1431 = scmp.lt.s32.totalorder %s1430, 63
        %s1432 = scalar_select %p1431, %s1430, 63
        %s1433 = smul.addr %s1432, 8
        %s1434 = scalar_lea.vmem %s7, %s1433
      $region60: #{tpu_custom_call.1} parent=55 // pred_fallthru
        _
    $region56: #{tpu_custom_call.1} parent=5 // pred_fallthru
      _
  $region6: #{tpu_custom_call.1} parent=0 // loop_footer
    %s17 = sadd.s32 1, %s13
  $region7: #{tpu_custom_call.1} parent=0 // loop_footer_branch
    %12 = sbr.rel target = $region3
  $region8: #{tpu_custom_call.1} parent=0 // loop_exit
    _

</llo_original>
